<compile_context>
chip_gen: v7x
topology: tpu7x:2x2x1
jax: 0.10.0
libtpu: 0.0.40
codegen_flags: <defaults>
</compile_context>

<pallas_src>
import jax
import jax.numpy as jnp
from jax.experimental import pallas as pl
from jax.experimental.pallas import tpu as pltpu

_EPS = 1e-12  # F.normalize default eps
_C = 7        # fixed channel count of the module


def _gripper_kernel(x_ref, o_ref):
    # x_ref / o_ref: (block_b, 7, tile_n) in VMEM.
    # Read channel groups straight from the ref (no full-block materialization).

    # approach: channels 0:3 -> tanh + L2-normalize over the channel dim.
    a = jnp.tanh(x_ref[:, 0:3, :].astype(jnp.float32))
    a_ss = jnp.sum(a * a, axis=1, keepdims=True)
    a_inv = jax.lax.rsqrt(jnp.maximum(a_ss, _EPS * _EPS))  # == 1/max(norm, eps)
    o_ref[:, 0:3, :] = (a * a_inv).astype(o_ref.dtype)

    # beta: channels 3:5 -> tanh + L2-normalize over the channel dim.
    b = jnp.tanh(x_ref[:, 3:5, :].astype(jnp.float32))
    b_ss = jnp.sum(b * b, axis=1, keepdims=True)
    b_inv = jax.lax.rsqrt(jnp.maximum(b_ss, _EPS * _EPS))
    o_ref[:, 3:5, :] = (b * b_inv).astype(o_ref.dtype)

    # dist + width: fused 2-row sigmoid.  sigmoid(x) == 0.5*(tanh(x/2)+1):
    # single EUP pass per element (vs exp + reciprocal).
    dw = x_ref[:, 5:7, :].astype(jnp.float32)
    o_ref[:, 5:7, :] = (0.5 * (jnp.tanh(0.5 * dw) + 1.0)).astype(o_ref.dtype)


def _choose_blocking(B, N, itemsize):
    """One blocking rule for all shapes/dtypes.

    Returns (block_b, tile_n).  Targets ~2 MiB per buffer (mem-bound roofline
    plateau, safe for v7x's smaller VMEM), capped at total_bytes/8 so the
    'parallel' grid keeps >= ~8 steps when the problem is big enough.
    """
    total = B * _C * N * itemsize
    target = min(2 << 20, max(_C * 128 * itemsize, total // 8))

    row_bytes = _C * N * itemsize
    if row_bytes <= target:
        # One full-N row fits the budget; full-dim lane block is always legal
        # (even when N is not a multiple of 128).
        tile_n = N
    else:
        # Lane tile: multiple of 128, <= 2048; cdiv grid masks the partial tail.
        tile_n = max(128, min(2048, (target // (_C * itemsize)) // 128 * 128))

    tile_bytes = _C * tile_n * itemsize
    block_b = max(1, min(B, target // tile_bytes))
    return block_b, tile_n


def gripper_grasp_regressor(x, *, block_b=None, tile_n=None):
    """x: (B, 7, N). Returns (B, 7, N) with the GripperGraspRegressor forward."""
    B, C, N = x.shape
    assert C == _C, "GripperGraspRegressor expects 7 channels"

    itemsize = jnp.dtype(x.dtype).itemsize
    auto_b, auto_n = _choose_blocking(B, N, itemsize)
    if block_b is None:
        block_b = auto_b
    if tile_n is None:
        tile_n = auto_n

    grid = (pl.cdiv(B, block_b), pl.cdiv(N, tile_n))

    return pl.pallas_call(
        _gripper_kernel,
        out_shape=jax.ShapeDtypeStruct((B, C, N), x.dtype),
        grid_spec=pl.GridSpec(
            grid=grid,
            in_specs=[pl.BlockSpec((block_b, C, tile_n), lambda bi, ni: (bi, 0, ni))],
            out_specs=pl.BlockSpec((block_b, C, tile_n), lambda bi, ni: (bi, 0, ni)),
        ),
        compiler_params=pltpu.CompilerParams(
            dimension_semantics=("parallel", "parallel"),
        ),
    )(x)


def _reference(x):
    x = x.astype(jnp.float32)
    approach = jnp.tanh(x[:, 0:3, :])
    approach = approach / jnp.maximum(
        jnp.linalg.norm(approach, axis=1, keepdims=True), _EPS
    )
    beta = jnp.tanh(x[:, 3:5, :])
    beta = beta / jnp.maximum(jnp.linalg.norm(beta, axis=1, keepdims=True), _EPS)
    dist = jax.nn.sigmoid(x[:, 5:6, :])
    width = jax.nn.sigmoid(x[:, 6:7, :])
    return jnp.concatenate([approach, beta, dist, width], axis=1)


if __name__ == "__main__":
    key = jax.random.PRNGKey(0)
    k1, k2, k3 = jax.random.split(key, 3)

    # 1) Small aligned f32 case (batch-blocked grid).
    x1 = jax.random.normal(k1, (2, 7, 128), dtype=jnp.float32)
    o1 = jax.block_until_ready(gripper_grasp_regressor(x1))
    assert o1.shape == x1.shape
    assert jnp.allclose(o1, _reference(x1), atol=1e-5, rtol=1e-5)

    # 2) N not a multiple of 128 -> masked partial lane block on the cdiv grid.
    x2 = jax.random.normal(k2, (3, 7, 200), dtype=jnp.float32)
    o2 = jax.block_until_ready(gripper_grasp_regressor(x2))
    assert jnp.allclose(o2, _reference(x2), atol=1e-5, rtol=1e-5)

    # 3) bf16 I/O (f32 internal math), multi-step lane-tiled grid.
    x3 = jax.random.normal(k3, (4, 7, 384), dtype=jnp.bfloat16)
    o3 = jax.block_until_ready(gripper_grasp_regressor(x3))
    ref3 = _reference(x3).astype(jnp.bfloat16)
    assert jnp.allclose(
        o3.astype(jnp.float32), ref3.astype(jnp.float32), atol=2e-2, rtol=2e-2
    )

    print("KERNEL_OK")
</pallas_src>

<mosaic_0001>
module attributes {stable_mosaic.version = 11 : i64} {
  func.func @_gripper_kernel(%arg0: i32, %arg1: i32, %arg2: memref<1x7x128xf32, #tpu.memory_space<vmem>>, %arg3: memref<1x7x128xf32, #tpu.memory_space<vmem>>) attributes {dimension_semantics = [#tpu.dimension_semantics<parallel>, #tpu.dimension_semantics<parallel>], iteration_bounds = array<i64: 2, 1>, scalar_prefetch = 0 : i64, scratch_operands = 0 : i64, tpu.core_type = #tpu.core_type<tc>, window_params = [{transform_indices = @transform_0, window_bounds = array<i64: 1, 7, 128>}, {transform_indices = @transform_1, window_bounds = array<i64: 1, 7, 128>}]} {
    %c0 = arith.constant 0 : index
    %c0_0 = arith.constant 0 : index
    %c0_1 = arith.constant 0 : index
    %0 = vector.load %arg2[%c0, %c0_0, %c0_1] : memref<1x7x128xf32, #tpu.memory_space<vmem>>, vector<1x3x128xf32>
    %1 = math.tanh %0 : vector<1x3x128xf32>
    %2 = arith.mulf %1, %1 : vector<1x3x128xf32>
    %cst = arith.constant dense<0.000000e+00> : vector<1x128xf32>
    %3 = vector.multi_reduction <add>, %2, %cst [1] : vector<1x3x128xf32> to vector<1x128xf32>
    %4 = vector.shape_cast %3 : vector<1x128xf32> to vector<1x1x128xf32>
    %cst_2 = arith.constant 1.000000e-24 : f32
    %5 = vector.broadcast %cst_2 : f32 to vector<1x1x128xf32>
    %6 = arith.maximumf %4, %5 : vector<1x1x128xf32>
    %7 = math.rsqrt %6 : vector<1x1x128xf32>
    %8 = vector.broadcast %7 : vector<1x1x128xf32> to vector<1x3x128xf32>
    %9 = arith.mulf %1, %8 : vector<1x3x128xf32>
    %c0_3 = arith.constant 0 : index
    %c0_4 = arith.constant 0 : index
    %c0_5 = arith.constant 0 : index
    %10 = vector.load %arg3[%c0_3, %c0_4, %c0_5] : memref<1x7x128xf32, #tpu.memory_space<vmem>>, vector<1x3x128xf32>
    tpu.vector_store %arg3[%c0_3, %c0_4, %c0_5], %9 {strides = array<i32>} : memref<1x7x128xf32, #tpu.memory_space<vmem>>, vector<1x3x128xf32>,
    %c0_6 = arith.constant 0 : index
    %c3 = arith.constant 3 : index
    %c0_7 = arith.constant 0 : index
    %11 = vector.load %arg2[%c0_6, %c3, %c0_7] : memref<1x7x128xf32, #tpu.memory_space<vmem>>, vector<1x2x128xf32>
    %12 = math.tanh %11 : vector<1x2x128xf32>
    %13 = arith.mulf %12, %12 : vector<1x2x128xf32>
    %cst_8 = arith.constant dense<0.000000e+00> : vector<1x128xf32>
    %14 = vector.multi_reduction <add>, %13, %cst_8 [1] : vector<1x2x128xf32> to vector<1x128xf32>
    %15 = vector.shape_cast %14 : vector<1x128xf32> to vector<1x1x128xf32>
    %cst_9 = arith.constant 1.000000e-24 : f32
    %16 = vector.broadcast %cst_9 : f32 to vector<1x1x128xf32>
    %17 = arith.maximumf %15, %16 : vector<1x1x128xf32>
    %18 = math.rsqrt %17 : vector<1x1x128xf32>
    %19 = vector.broadcast %18 : vector<1x1x128xf32> to vector<1x2x128xf32>
    %20 = arith.mulf %12, %19 : vector<1x2x128xf32>
    %c0_10 = arith.constant 0 : index
    %c3_11 = arith.constant 3 : index
    %c0_12 = arith.constant 0 : index
    %21 = vector.load %arg3[%c0_10, %c3_11, %c0_12] : memref<1x7x128xf32, #tpu.memory_space<vmem>>, vector<1x2x128xf32>
    tpu.vector_store %arg3[%c0_10, %c3_11, %c0_12], %20 {strides = array<i32>} : memref<1x7x128xf32, #tpu.memory_space<vmem>>, vector<1x2x128xf32>,
    %c0_13 = arith.constant 0 : index
    %c5 = arith.constant 5 : index
    %c0_14 = arith.constant 0 : index
    %22 = vector.load %arg2[%c0_13, %c5, %c0_14] : memref<1x7x128xf32, #tpu.memory_space<vmem>>, vector<1x2x128xf32>
    %cst_15 = arith.constant 5.000000e-01 : f32
    %23 = vector.broadcast %cst_15 : f32 to vector<1x2x128xf32>
    %24 = arith.mulf %23, %22 : vector<1x2x128xf32>
    %25 = math.tanh %24 : vector<1x2x128xf32>
    %cst_16 = arith.constant 1.000000e+00 : f32
    %26 = vector.broadcast %cst_16 : f32 to vector<1x2x128xf32>
    %27 = arith.addf %25, %26 : vector<1x2x128xf32>
    %cst_17 = arith.constant 5.000000e-01 : f32
    %28 = vector.broadcast %cst_17 : f32 to vector<1x2x128xf32>
    %29 = arith.mulf %28, %27 : vector<1x2x128xf32>
    %c0_18 = arith.constant 0 : index
    %c5_19 = arith.constant 5 : index
    %c0_20 = arith.constant 0 : index
    %30 = vector.load %arg3[%c0_18, %c5_19, %c0_20] : memref<1x7x128xf32, #tpu.memory_space<vmem>>, vector<1x2x128xf32>
    tpu.vector_store %arg3[%c0_18, %c5_19, %c0_20], %29 {strides = array<i32>} : memref<1x7x128xf32, #tpu.memory_space<vmem>>, vector<1x2x128xf32>,
    return
  }
  func.func @transform_0(%arg0: i32, %arg1: i32) -> (i32, i32, i32) {
    %c0_i32 = arith.constant 0 : i32
    %c0_i32_0 = arith.constant 0 : i32
    return %arg0, %c0_i32, %arg1 : i32, i32, i32
  }
  func.func @transform_1(%arg0: i32, %arg1: i32) -> (i32, i32, i32) {
    %c0_i32 = arith.constant 0 : i32
    %c0_i32_0 = arith.constant 0 : i32
    return %arg0, %c0_i32, %arg1 : i32, i32, i32
  }
}

</mosaic_0001>

<llo_original>
// kernel: tpu_custom_call.1
$region0: #{tpu_custom_call.1}
  #allocation0 [shape = 'u32[]', space=smem, size = 0x4, offset = 0x4, fixed_abs, tag = 'smem constant byte address 0x4 - core index']
  #allocation1 [shape = 'u32[144,128]{1,0:T(1,128)}', space=vmem, size = 0x12000, scoped, tag = 'internal scratch']
  %s0 = inlined_call_operand.vmem [shape: f32[2,7,128], index: 0, kind: input, shape index: {}]
  %s1 = inlined_call_operand.vmem [shape: f32[2,7,128], index: 1, kind: output, shape index: {}]
  %s2 = sld [smem:[#allocation0]]
  $region37: #{tpu_custom_call.1} parent=0
    _
  %s4 = ssub.s32 1, %s2
  %s5 = scalar_select 0, %s4, %s2
  loop: start=0, step=1, limit=4
  $region2: #{tpu_custom_call.1} parent=0 // loop_pre_header
    _
  $region3: #{tpu_custom_call.1} parent=0 // loop_header
    %s7 = sphi 0, %s11
    %p8 = scmp.ge.s32.totalorder %s7, 4
    %s14 = sphi 0, %s26
    %s15 = sphi 0, %s22
    %s16 = sphi 0, %s14
    %s17 = sphi 0, %s15
    %s18 = sphi 0, %s16
    %s19 = sphi 0, %s17
    %s31 = sphi 0, %s33
    %s34 = sphi 0, %s31
    %s35 = sphi 0, %s34
    %s51 = sphi 0, %s35
    %s59 = sphi 0, %s61
    %s62 = sphi 0, %s59
    %s63 = sphi 0, %s62
    %s79 = sphi 0, %s63
  $region4: #{tpu_custom_call.1} parent=0 // loop_header_branch
    %10 = sbr.rel (%p8) target = $region8
  $region5: #{tpu_custom_call.1} parent=0 // loop_body
    %s12 = ssub.s32 %s7, 1
    %s13 = ssub.s32 %s7, 2
    %s20 = sadd.s32 1, %s15
    %p21 = scmp.ge.s32.totalorder %s20, 1
    %s22 = scalar_select %p21, 0, %s20
    %s23 = sadd.s32 1, %s14
    %s24 = scalar_select %p21, %s23, %s14
    %p25 = scmp.ge.s32.totalorder %s24, 2
    %s26 = scalar_select %p25, 0, %s24
    %s27 = ssub.s32 %s14, %s26
    %s28 = ssub.s32 %s15, %s22
    %s29 = sor.u32 %s27, %s28
    %p30 = scmp.eq.s32.totalorder %s29, 0
    %s32 = sadd.s32 %s31, 1
    %s33 = scalar_select %p30, %s31, %s32
    %p36 = pneg %p30
    %p37 = scmp.eq.s32.totalorder %s7, 1
    %p38 = por %p36, %p37
    %p39 = scmp.ne.s32.totalorder %s31, %s34
    %p40 = scmp.eq.s32.totalorder %s7, 0
    %p41 = por %p39, %p40
    %p42 = scmp.ne.s32.totalorder %s31, %s34
    %p43 = scmp.eq.s32.totalorder %s12, 1
    %p44 = por %p42, %p43
    %p45 = scmp.ne.s32.totalorder %s34, %s35
    %p46 = scmp.eq.s32.totalorder %s12, 0
    %p47 = por %p45, %p46
    %p48 = scmp.ne.s32.totalorder %s34, %s35
    %p49 = scmp.eq.s32.totalorder %s13, 1
    %p50 = por %p48, %p49
    %p52 = scmp.ne.s32.totalorder %s35, %s51
    %p53 = scmp.eq.s32.totalorder %s13, 0
    %p54 = por %p52, %p53
    %s55 = ssub.s32 %s14, %s26
    %s56 = ssub.s32 %s15, %s22
    %s57 = sor.u32 %s55, %s56
    %p58 = scmp.eq.s32.totalorder %s57, 0
    %s60 = sadd.s32 %s59, 1
    %s61 = scalar_select %p58, %s59, %s60
    %p64 = pneg %p58
    %p65 = scmp.eq.s32.totalorder %s7, 1
    %p66 = por %p64, %p65
    %p67 = scmp.ne.s32.totalorder %s59, %s62
    %p68 = scmp.eq.s32.totalorder %s7, 0
    %p69 = por %p67, %p68
    %p70 = scmp.ne.s32.totalorder %s59, %s62
    %p71 = scmp.eq.s32.totalorder %s12, 1
    %p72 = por %p70, %p71
    %p73 = scmp.ne.s32.totalorder %s62, %s63
    %p74 = scmp.eq.s32.totalorder %s12, 0
    %p75 = por %p73, %p74
    %p76 = scmp.ne.s32.totalorder %s62, %s63
    %p77 = scmp.eq.s32.totalorder %s13, 1
    %p78 = por %p76, %p77
    %p80 = scmp.ne.s32.totalorder %s63, %s79
    %p81 = scmp.eq.s32.totalorder %s13, 0
    %p82 = por %p80, %p81
    %p83 = scmp.le.s32.totalorder 1, %s7
    %p84 = scmp.lt.s32.totalorder %s7, 3
    %p85 = pnand %p83, %p84
    %p86 = pneg %p85
    // Predicated region
    $region9: #{tpu_custom_call.1} parent=5 // pred_check
      _
    $region10: #{tpu_custom_call.1} parent=5 // pred_check_branch
      %88 = sbr.rel (%p85) target = $region12
    $region11: #{tpu_custom_call.1} parent=5 // pred_region
      %s89 = ssub.s32 %s7, 1
    $region12: #{tpu_custom_call.1} parent=5 // pred_fallthru
      _
    %p90 = scmp.lt.s32.totalorder %s7, 2
    // Predicated region
    $region13: #{tpu_custom_call.1} parent=5 // pred_check
      %p91 = pneg %p90
    $region14: #{tpu_custom_call.1} parent=5 // pred_check_branch
      %93 = sbr.rel (%p91) target = $region16
    $region15: #{tpu_custom_call.1} parent=5 // pred_region
      // Predicated region
      $region17: #{tpu_custom_call.1} parent=15 // pred_check
        %p94 = pneg %p41
      $region18: #{tpu_custom_call.1} parent=15 // pred_check_branch
        %96 = sbr.rel (%p94) target = $region20
      $region19: #{tpu_custom_call.1} parent=15 // pred_region
        %p97 = scmp.lt.s32.totalorder %s14, 1
        %s98 = scalar_select %p97, %s14, 1
        %p99 = scmp.lt.s32.totalorder %s15, 0
        %s100 = scalar_select %p99, %s15, 0
        %s101 = sadd.s32 %s100, %s98
        %s102 = smul.addr %s101, 8
        %s103 = scalar_lea.vmem %s0, %s102
      $region20: #{tpu_custom_call.1} parent=15 // pred_fallthru
        _
    $region16: #{tpu_custom_call.1} parent=5 // pred_fallthru
      _
    %p104 = scmp.le.s32.totalorder 1, %s7
    %p105 = scmp.lt.s32.totalorder %s7, 3
    %p106 = pnand %p104, %p105
    %p107 = pneg %p106
    // Predicated region
    $region21: #{tpu_custom_call.1} parent=5 // pred_check
      _
    $region22: #{tpu_custom_call.1} parent=5 // pred_check_branch
      %109 = sbr.rel (%p106) target = $region24
    $region23: #{tpu_custom_call.1} parent=5 // pred_region
      %s110 = ssub.s32 %s7, 1
      %p111 = scmp.lt.s32.totalorder %s16, 1
      %s112 = scalar_select %p111, %s16, 1
      %p113 = scmp.lt.s32.totalorder %s17, 0
      %s114 = scalar_select %p113, %s17, 0
      %s115 = sadd.s32 %s114, %s112
      %s116 = smul.addr %s115, 8
      %s117 = scalar_lea.vmem %s0, %s116
      %p118 = pneg %p47
      %p119 = pneg %p44
      %p120 = pneg %p75
      %p121 = pneg %p72
      %p122 = scmp.lt.s32.totalorder %s16, 1
      %s123 = scalar_select %p122, %s16, 1
      %p124 = scmp.lt.s32.totalorder %s17, 0
      %s125 = scalar_select %p124, %s17, 0
      %s126 = sadd.s32 %s125, %s123
      %s127 = smul.addr %s126, 8
      %s128 = scalar_lea.vmem %s1, %s127
      %p129 = scmp.lt.s32.totalorder %s16, 1
      %s130 = scalar_select %p129, %s16, 1
      %p131 = scmp.lt.s32.totalorder %s17, 0
      %s132 = scalar_select %p131, %s17, 0
      %s133 = sadd.s32 %s132, %s130
      %s134 = smul.addr %s133, 8
      %s135 = scalar_lea.vmem %s0, %s134
      %p136 = scmp.lt.s32.totalorder %s16, 1
      %s137 = scalar_select %p136, %s16, 1
      %p138 = scmp.lt.s32.totalorder %s17, 0
      %s139 = scalar_select %p138, %s17, 0
      %s140 = sadd.s32 %s139, %s137
      %s141 = smul.addr %s140, 8
      %s142 = scalar_lea.vmem %s1, %s141
      %v143 = vld [vmem:[%s135] sm:$0x7]
      %v144 = vtanh.pop %v143
      %v145 = vmul.f32 %v144, %v144
      %vm146 = vcmask 1042432
      %v147 = vsel %vm146, %v145, 0.0
      %v148 = vrot.slane %v147, 4
      %v149 = vadd.f32 %v147, %v148
      %v150 = vrot.slane %v149, 2
      %v151 = vadd.f32 %v149, %v150
      %v152 = vrot.slane %v151, 1
      %v153 = vadd.f32 %v151, %v152
      %v154 = vmax.f32 %v153, 1e-24
      %v155 = vrsqrt.pop %v154
      %v156 = vmul.f32 %v144, %v155
      %157 = vst [vmem:[%s142] sm:$0x7] %v156
      %v158 = vld [vmem:[%s135 + $0x3] sm:$0x3]
      %v159 = vtanh.pop %v158
      %v160 = vmul.f32 %v159, %v159
      %vm161 = vcmask 1041408
      %v162 = vsel %vm161, %v160, 0.0
      %v163 = vrot.slane %v162, 4
      %v164 = vadd.f32 %v162, %v163
      %v165 = vrot.slane %v164, 2
      %v166 = vadd.f32 %v164, %v165
      %v167 = vrot.slane %v166, 1
      %v168 = vadd.f32 %v166, %v167
      %v169 = vmax.f32 %v168, 1e-24
      %v170 = vrsqrt.pop %v169
      %v171 = vmul.f32 %v159, %v170
      %172 = vst [vmem:[%s142 + $0x3] sm:$0x3] %v171
      %v173 = vld [vmem:[%s135 + $0x5] sm:$0x3]
      %v174 = vmul.f32 %v173, 0.5
      %v175 = vtanh.pop %v174
      %v176 = vadd.f32 %v175, 1.0
      %v177 = vmul.f32 %v176, 0.5
      %178 = vst [vmem:[%s142 + $0x5] sm:$0x3] %v177
      %p179 = scmp.lt.s32.totalorder %s16, 1
      %s180 = scalar_select %p179, %s16, 1
      %p181 = scmp.lt.s32.totalorder %s17, 0
      %s182 = scalar_select %p181, %s17, 0
      %s183 = sadd.s32 %s182, %s180
      %s184 = smul.addr %s183, 8
      %s185 = scalar_lea.vmem %s1, %s184
      // Predicated region
      $region25: #{tpu_custom_call.1} parent=23 // pred_check
        %p186 = pneg %p72
      $region26: #{tpu_custom_call.1} parent=23 // pred_check_branch
        %188 = sbr.rel (%p186) target = $region28
      $region27: #{tpu_custom_call.1} parent=23 // pred_region
        _
      $region28: #{tpu_custom_call.1} parent=23 // pred_fallthru
        _
    $region24: #{tpu_custom_call.1} parent=5 // pred_fallthru
      _
    %p189 = scmp.le.s32.totalorder 2, %s7
    // Predicated region
    $region29: #{tpu_custom_call.1} parent=5 // pred_check
      %p190 = pneg %p189
    $region30: #{tpu_custom_call.1} parent=5 // pred_check_branch
      %192 = sbr.rel (%p190) target = $region32
    $region31: #{tpu_custom_call.1} parent=5 // pred_region
      %s193 = ssub.s32 %s7, 2
      // Predicated region
      $region33: #{tpu_custom_call.1} parent=31 // pred_check
        %p194 = pneg %p78
      $region34: #{tpu_custom_call.1} parent=31 // pred_check_branch
        %196 = sbr.rel (%p194) target = $region36
      $region35: #{tpu_custom_call.1} parent=31 // pred_region
        %p197 = scmp.lt.s32.totalorder %s18, 1
        %s198 = scalar_select %p197, %s18, 1
        %p199 = scmp.lt.s32.totalorder %s19, 0
        %s200 = scalar_select %p199, %s19, 0
        %s201 = sadd.s32 %s200, %s198
        %s202 = smul.addr %s201, 8
        %s203 = scalar_lea.vmem %s1, %s202
      $region36: #{tpu_custom_call.1} parent=31 // pred_fallthru
        _
    $region32: #{tpu_custom_call.1} parent=5 // pred_fallthru
      _
  $region6: #{tpu_custom_call.1} parent=0 // loop_footer
    %s11 = sadd.s32 1, %s7
  $region7: #{tpu_custom_call.1} parent=0 // loop_footer_branch
    %6 = sbr.rel target = $region3
  $region8: #{tpu_custom_call.1} parent=0 // loop_exit
    _

</llo_original>
